<compile_context>
chip_gen: v5e
topology: v5e:2x2
jax: 0.10.0
libtpu: 0.0.40
codegen_flags: <defaults>
</compile_context>

<pallas_src>
import math

import jax
import jax.numpy as jnp
from jax.experimental import pallas as pl
from jax.experimental.pallas import tpu as pltpu

_LANE = 128    # vreg lane width
_SUBLANE = 8   # f32 sublane count


def _round_up(n, m):
    return ((n + m - 1) // m) * m


def actor_kernel(x_ref, w1_ref, b1_ref, w2_ref, b2_ref, w3_ref, b3_ref, out_ref):
    # Layer 1: bf16 MXU matmul, f32 accumulation; bias + ReLU in f32.
    h1 = jnp.dot(x_ref[...], w1_ref[...], preferred_element_type=jnp.float32)
    h1 = jnp.maximum(h1 + b1_ref[...], 0.0)
    # Layer 2.
    h2 = jnp.dot(h1.astype(jnp.bfloat16), w2_ref[...],
                 preferred_element_type=jnp.float32)
    h2 = jnp.maximum(h2 + b2_ref[...], 0.0)
    # Layer 3 -> logits.  Padded action columns have bias = -1e30 so their
    # softmax weight underflows to exactly 0.
    logits = jnp.dot(h2.astype(jnp.bfloat16), w3_ref[...],
                     preferred_element_type=jnp.float32)
    logits = logits + b3_ref[...]
    # Numerically stable softmax along the lane axis (all in f32).
    m = jnp.max(logits, axis=-1, keepdims=True)
    e = jnp.exp(logits - m)
    denom = jnp.sum(e, axis=-1, keepdims=True)
    out_ref[...] = (e * pl.reciprocal(denom, approx=False)).astype(out_ref.dtype)


def actor_forward(x, params, *, batch_tile=None):
    """x: [B, state_dim] f32 -> action probabilities [B, action_dim] f32."""
    w1, b1, w2, b2, w3, b3 = params
    B, state_dim = x.shape
    h1_dim = w1.shape[1]
    h2_dim = w2.shape[1]
    action_dim = w3.shape[1]

    # Lane-dense padded feature dims.
    sp = _round_up(state_dim, _LANE)
    h1p = _round_up(h1_dim, _LANE)
    h2p = _round_up(h2_dim, _LANE)
    ap = _round_up(action_dim, _LANE)

    # Batch tile: multiple of the f32 sublane count, capped so per-step tiles
    # stay comfortably inside v7x's 64 MiB VMEM even with wide hiddens.
    if batch_tile is None:
        batch_tile = min(512, _round_up(B, _SUBLANE))
    tb = _round_up(batch_tile, _SUBLANE)
    bp = _round_up(B, tb)
    grid = (bp // tb,)

    # Pad operands outside the kernel (layout plumbing; fused by XLA).
    xp = jnp.zeros((bp, sp), jnp.bfloat16).at[:B, :state_dim].set(
        x.astype(jnp.bfloat16))
    w1p = jnp.zeros((sp, h1p), jnp.bfloat16).at[:state_dim, :h1_dim].set(
        w1.astype(jnp.bfloat16))
    b1p = jnp.zeros((1, h1p), jnp.float32).at[:, :h1_dim].set(
        b1.astype(jnp.float32))
    w2p = jnp.zeros((h1p, h2p), jnp.bfloat16).at[:h1_dim, :h2_dim].set(
        w2.astype(jnp.bfloat16))
    b2p = jnp.zeros((1, h2p), jnp.float32).at[:, :h2_dim].set(
        b2.astype(jnp.float32))
    w3p = jnp.zeros((h2p, ap), jnp.bfloat16).at[:h2_dim, :action_dim].set(
        w3.astype(jnp.bfloat16))
    b3p = jnp.full((1, ap), -1e30, jnp.float32).at[:, :action_dim].set(
        b3.astype(jnp.float32))

    # Weights/biases: constant index_map -> VMEM-resident across grid steps.
    resident = lambda a: pl.BlockSpec(a.shape, lambda i: (0, 0))

    flops = 2 * bp * (sp * h1p + h1p * h2p + h2p * ap)
    transcendentals = bp * ap  # exp in softmax
    bytes_accessed = (xp.size * 2
                      + (w1p.size + w2p.size + w3p.size) * 2
                      + (b1p.size + b2p.size + b3p.size) * 4
                      + bp * ap * 4)

    # VMEM budget: resident weights + double-buffered x/out tiles + f32
    # intermediates, 2x headroom, capped at v7x's 64 MiB physical VMEM.
    resident_bytes = ((w1p.size + w2p.size + w3p.size) * 2
                      + (b1p.size + b2p.size + b3p.size) * 4)
    per_step_bytes = 2 * (tb * sp * 2) + 2 * (tb * ap * 4)
    scratch_bytes = 2 * tb * (h1p + h2p + ap) * 4
    vmem_limit = int(min(max(2 * (resident_bytes + per_step_bytes + scratch_bytes),
                             8 << 20), 64 << 20))

    out_padded = pl.pallas_call(
        actor_kernel,
        out_shape=jax.ShapeDtypeStruct((bp, ap), jnp.float32),
        grid_spec=pltpu.PrefetchScalarGridSpec(
            num_scalar_prefetch=0,
            grid=grid,
            in_specs=[
                pl.BlockSpec((tb, sp), lambda i: (i, 0)),   # x: tiled over rows
                resident(w1p), resident(b1p),
                resident(w2p), resident(b2p),
                resident(w3p), resident(b3p),
            ],
            out_specs=pl.BlockSpec((tb, ap), lambda i: (i, 0)),
        ),
        compiler_params=pltpu.CompilerParams(
            dimension_semantics=("parallel",),   # shard batch tiles across TCs (v7x)
            vmem_limit_bytes=vmem_limit,
        ),
        cost_estimate=pl.CostEstimate(
            flops=flops,
            transcendentals=transcendentals,
            bytes_accessed=bytes_accessed,
        ),
    )(xp, w1p, b1p, w2p, b2p, w3p, b3p)

    return out_padded[:B, :action_dim]


def xavier_uniform(key, fan_in, fan_out, dtype=jnp.float32):
    # Matches torch.nn.init.xavier_uniform_ (gain=1.0).
    bound = math.sqrt(6.0 / (fan_in + fan_out))
    return jax.random.uniform(key, (fan_in, fan_out), dtype=dtype,
                              minval=-bound, maxval=bound)


def make_actor_params(key, state_dim, action_dim, n_hidden_units):
    h0, h1 = n_hidden_units
    k1, k2, k3 = jax.random.split(key, 3)
    w1 = xavier_uniform(k1, state_dim, h0)
    b1 = jnp.full((1, h0), 0.01, jnp.float32)       # bias.data.fill_(0.01)
    w2 = xavier_uniform(k2, h0, h1)
    b2 = jnp.full((1, h1), 0.01, jnp.float32)
    w3 = xavier_uniform(k3, h1, action_dim)
    b3 = jnp.full((1, action_dim), 0.01, jnp.float32)
    return (w1, b1, w2, b2, w3, b3)


def actor_reference_f32(x, params):
    # Pure-f32 reference (matches the PyTorch module exactly).
    w1, b1, w2, b2, w3, b3 = params
    h1 = jax.nn.relu(x @ w1 + b1)
    h2 = jax.nn.relu(h1 @ w2 + b2)
    return jax.nn.softmax(h2 @ w3 + b3, axis=-1)


def actor_reference_bf16(x, params):
    # Same bf16-matmul / f32-accumulate recipe as the kernel.
    w1, b1, w2, b2, w3, b3 = params
    dot = lambda a, b: jnp.dot(a.astype(jnp.bfloat16), b.astype(jnp.bfloat16),
                               preferred_element_type=jnp.float32)
    h1 = jax.nn.relu(dot(x, w1) + b1)
    h2 = jax.nn.relu(dot(h1, w2) + b2)
    return jax.nn.softmax(dot(h2, w3) + b3, axis=-1)


if __name__ == "__main__":
    key = jax.random.PRNGKey(0)
    k_x, k_p = jax.random.split(key)

    batch = 4
    state_dim = 16
    n_hidden_units = (32, 32)
    action_dim = 8

    x = jax.random.normal(k_x, (batch, state_dim), jnp.float32)
    params = make_actor_params(k_p, state_dim, action_dim, n_hidden_units)

    probs = jax.block_until_ready(jax.jit(actor_forward)(x, params))

    ref_bf16 = actor_reference_bf16(x, params)
    ref_f32 = actor_reference_f32(x, params)

    assert probs.shape == (batch, action_dim)
    assert bool(jnp.all(jnp.isfinite(probs)))
    # Matches a bf16-matmul / f32-accumulate reference tightly ...
    assert jnp.allclose(probs, ref_bf16, atol=1e-3, rtol=1e-3)
    # ... and the pure-f32 PyTorch-equivalent reference within bf16 tolerance.
    assert jnp.allclose(probs, ref_f32, atol=2e-2, rtol=2e-2)
    # Each row is a valid probability distribution.
    assert jnp.allclose(jnp.sum(probs, axis=-1), jnp.ones((batch,)), atol=1e-5)

    print("KERNEL_OK")
</pallas_src>

<mosaic_0001>
module attributes {stable_mosaic.version = 11 : i64} {
  func.func @actor_kernel(%arg0: i32, %arg1: memref<8x128xbf16, #tpu.memory_space<vmem>>, %arg2: memref<128x128xbf16, #tpu.memory_space<vmem>>, %arg3: memref<1x128xf32, #tpu.memory_space<vmem>>, %arg4: memref<128x128xbf16, #tpu.memory_space<vmem>>, %arg5: memref<1x128xf32, #tpu.memory_space<vmem>>, %arg6: memref<128x128xbf16, #tpu.memory_space<vmem>>, %arg7: memref<1x128xf32, #tpu.memory_space<vmem>>, %arg8: memref<8x128xf32, #tpu.memory_space<vmem>>) attributes {dimension_semantics = [#tpu.dimension_semantics<parallel>], iteration_bounds = array<i64: 1>, scalar_prefetch = 0 : i64, scratch_operands = 0 : i64, tpu.core_type = #tpu.core_type<tc>, window_params = [{transform_indices = @transform_0, window_bounds = array<i64: 8, 128>}, {pipeline_mode = #tpu.pipeline_mode<synchronous>, transform_indices = @transform_1, window_bounds = array<i64: 128, 128>}, {pipeline_mode = #tpu.pipeline_mode<synchronous>, transform_indices = @transform_2, window_bounds = array<i64: 1, 128>}, {pipeline_mode = #tpu.pipeline_mode<synchronous>, transform_indices = @transform_3, window_bounds = array<i64: 128, 128>}, {pipeline_mode = #tpu.pipeline_mode<synchronous>, transform_indices = @transform_4, window_bounds = array<i64: 1, 128>}, {pipeline_mode = #tpu.pipeline_mode<synchronous>, transform_indices = @transform_5, window_bounds = array<i64: 128, 128>}, {pipeline_mode = #tpu.pipeline_mode<synchronous>, transform_indices = @transform_6, window_bounds = array<i64: 1, 128>}, {transform_indices = @transform_7, window_bounds = array<i64: 8, 128>}]} {
    %c0 = arith.constant 0 : index
    %c0_0 = arith.constant 0 : index
    %0 = vector.load %arg1[%c0, %c0_0] : memref<8x128xbf16, #tpu.memory_space<vmem>>, vector<8x128xbf16>
    %c0_1 = arith.constant 0 : index
    %c0_2 = arith.constant 0 : index
    %1 = vector.load %arg2[%c0_1, %c0_2] : memref<128x128xbf16, #tpu.memory_space<vmem>>, vector<128x128xbf16>
    %cst = arith.constant dense<0.000000e+00> : vector<8x128xf32>
    %2 = tpu.matmul %0, %1, %cst {dimension_numbers = #tpu.dot_dimension_numbers<[1], [0], [0], [1], [0, 0, 1, 1], [], []>} : vector<8x128xbf16>, vector<128x128xbf16>, vector<8x128xf32> -> vector<8x128xf32>
    %c0_3 = arith.constant 0 : index
    %c0_4 = arith.constant 0 : index
    %3 = vector.load %arg3[%c0_3, %c0_4] : memref<1x128xf32, #tpu.memory_space<vmem>>, vector<1x128xf32>
    %4 = vector.broadcast %3 : vector<1x128xf32> to vector<8x128xf32>
    %5 = arith.addf %2, %4 : vector<8x128xf32>
    %cst_5 = arith.constant 0.000000e+00 : f32
    %6 = vector.broadcast %cst_5 : f32 to vector<8x128xf32>
    %7 = arith.maximumf %5, %6 : vector<8x128xf32>
    %8 = arith.truncf %7 : vector<8x128xf32> to vector<8x128xbf16>
    %c0_6 = arith.constant 0 : index
    %c0_7 = arith.constant 0 : index
    %9 = vector.load %arg4[%c0_6, %c0_7] : memref<128x128xbf16, #tpu.memory_space<vmem>>, vector<128x128xbf16>
    %cst_8 = arith.constant dense<0.000000e+00> : vector<8x128xf32>
    %10 = tpu.matmul %8, %9, %cst_8 {dimension_numbers = #tpu.dot_dimension_numbers<[1], [0], [0], [1], [0, 0, 1, 1], [], []>} : vector<8x128xbf16>, vector<128x128xbf16>, vector<8x128xf32> -> vector<8x128xf32>
    %c0_9 = arith.constant 0 : index
    %c0_10 = arith.constant 0 : index
    %11 = vector.load %arg5[%c0_9, %c0_10] : memref<1x128xf32, #tpu.memory_space<vmem>>, vector<1x128xf32>
    %12 = vector.broadcast %11 : vector<1x128xf32> to vector<8x128xf32>
    %13 = arith.addf %10, %12 : vector<8x128xf32>
    %cst_11 = arith.constant 0.000000e+00 : f32
    %14 = vector.broadcast %cst_11 : f32 to vector<8x128xf32>
    %15 = arith.maximumf %13, %14 : vector<8x128xf32>
    %16 = arith.truncf %15 : vector<8x128xf32> to vector<8x128xbf16>
    %c0_12 = arith.constant 0 : index
    %c0_13 = arith.constant 0 : index
    %17 = vector.load %arg6[%c0_12, %c0_13] : memref<128x128xbf16, #tpu.memory_space<vmem>>, vector<128x128xbf16>
    %cst_14 = arith.constant dense<0.000000e+00> : vector<8x128xf32>
    %18 = tpu.matmul %16, %17, %cst_14 {dimension_numbers = #tpu.dot_dimension_numbers<[1], [0], [0], [1], [0, 0, 1, 1], [], []>} : vector<8x128xbf16>, vector<128x128xbf16>, vector<8x128xf32> -> vector<8x128xf32>
    %c0_15 = arith.constant 0 : index
    %c0_16 = arith.constant 0 : index
    %19 = vector.load %arg7[%c0_15, %c0_16] : memref<1x128xf32, #tpu.memory_space<vmem>>, vector<1x128xf32>
    %20 = vector.broadcast %19 : vector<1x128xf32> to vector<8x128xf32>
    %21 = arith.addf %18, %20 : vector<8x128xf32>
    %cst_17 = arith.constant dense<0xFF800000> : vector<8xf32>
    %22 = vector.multi_reduction <maximumf>, %21, %cst_17 [1] : vector<8x128xf32> to vector<8xf32>
    %23 = vector.shape_cast %22 : vector<8xf32> to vector<8x1xf32>
    %24 = vector.broadcast %23 : vector<8x1xf32> to vector<8x128xf32>
    %25 = arith.subf %21, %24 : vector<8x128xf32>
    %26 = math.exp %25 : vector<8x128xf32>
    %cst_18 = arith.constant dense<0.000000e+00> : vector<8xf32>
    %27 = vector.multi_reduction <add>, %26, %cst_18 [1] : vector<8x128xf32> to vector<8xf32>
    %28 = vector.shape_cast %27 : vector<8xf32> to vector<8x1xf32>
    %29 = tpu.reciprocal %28 : vector<8x1xf32> -> vector<8x1xf32>
    %30 = vector.broadcast %29 : vector<8x1xf32> to vector<8x128xf32>
    %31 = arith.mulf %26, %30 : vector<8x128xf32>
    %c0_19 = arith.constant 0 : index
    %c0_20 = arith.constant 0 : index
    %32 = vector.load %arg8[%c0_19, %c0_20] : memref<8x128xf32, #tpu.memory_space<vmem>>, vector<8x128xf32>
    tpu.vector_store %arg8[%c0_19, %c0_20], %31 {strides = array<i32>} : memref<8x128xf32, #tpu.memory_space<vmem>>, vector<8x128xf32>,
    return
  }
  func.func @transform_0(%arg0: i32) -> (i32, i32) {
    %c0_i32 = arith.constant 0 : i32
    %c0_i32_0 = arith.constant 0 : i32
    return %arg0, %c0_i32 : i32, i32
  }
  func.func @transform_1(%arg0: i32) -> (i32, i32) {
    %c0_i32 = arith.constant 0 : i32
    %c0_i32_0 = arith.constant 0 : i32
    %c0_i32_1 = arith.constant 0 : i32
    return %c0_i32, %c0_i32_0 : i32, i32
  }
  func.func @transform_2(%arg0: i32) -> (i32, i32) {
    %c0_i32 = arith.constant 0 : i32
    %c0_i32_0 = arith.constant 0 : i32
    %c0_i32_1 = arith.constant 0 : i32
    return %c0_i32, %c0_i32_0 : i32, i32
  }
  func.func @transform_3(%arg0: i32) -> (i32, i32) {
    %c0_i32 = arith.constant 0 : i32
    %c0_i32_0 = arith.constant 0 : i32
    %c0_i32_1 = arith.constant 0 : i32
    return %c0_i32, %c0_i32_0 : i32, i32
  }
  func.func @transform_4(%arg0: i32) -> (i32, i32) {
    %c0_i32 = arith.constant 0 : i32
    %c0_i32_0 = arith.constant 0 : i32
    %c0_i32_1 = arith.constant 0 : i32
    return %c0_i32, %c0_i32_0 : i32, i32
  }
  func.func @transform_5(%arg0: i32) -> (i32, i32) {
    %c0_i32 = arith.constant 0 : i32
    %c0_i32_0 = arith.constant 0 : i32
    %c0_i32_1 = arith.constant 0 : i32
    return %c0_i32, %c0_i32_0 : i32, i32
  }
  func.func @transform_6(%arg0: i32) -> (i32, i32) {
    %c0_i32 = arith.constant 0 : i32
    %c0_i32_0 = arith.constant 0 : i32
    %c0_i32_1 = arith.constant 0 : i32
    return %c0_i32, %c0_i32_0 : i32, i32
  }
  func.func @transform_7(%arg0: i32) -> (i32, i32) {
    %c0_i32 = arith.constant 0 : i32
    %c0_i32_0 = arith.constant 0 : i32
    return %arg0, %c0_i32 : i32, i32
  }
}

</mosaic_0001>

<llo_original>
// kernel: actor_forward.1
$region0: #{actor_forward.1}
  #allocation0 [shape = 'u32[]', space=smem, size = 0x4, offset = 0x4, fixed_abs, tag = 'smem constant byte address 0x4 - core index']
  #allocation1 [shape = 'u32[72,128]{1,0:T(1,128)}', space=vmem, size = 0x9000, scoped, tag = 'internal scratch']
  %s0 = inlined_call_operand.vmem [shape: bf16[8,128], index: 0, kind: input, shape index: {}]
  %s1 = inlined_call_operand.vmem [shape: bf16[128,128], index: 1, kind: input, shape index: {}]
  %s2 = inlined_call_operand.vmem [shape: f32[1,128], index: 2, kind: input, shape index: {}]
  %s3 = inlined_call_operand.vmem [shape: bf16[128,128], index: 3, kind: input, shape index: {}]
  %s4 = inlined_call_operand.vmem [shape: f32[1,128], index: 4, kind: input, shape index: {}]
  %s5 = inlined_call_operand.vmem [shape: bf16[128,128], index: 5, kind: input, shape index: {}]
  %s6 = inlined_call_operand.vmem [shape: f32[1,128], index: 6, kind: input, shape index: {}]
  %s7 = inlined_call_operand.vmem [shape: f32[8,128], index: 7, kind: output, shape index: {}]
  %s8 = sld [smem:[#allocation0]]
  $region38: #{actor_forward.1} parent=0
    _
  %s10 = ssub.s32 1, %s8
  %s11 = scalar_select 0, %s10, %s8
  // Predicated region
  $region2: #{actor_forward.1} parent=0 // pred_check
    _
  $region3: #{actor_forward.1} parent=0 // pred_check_branch
    %13 = sbr.rel (0) target = $region5
  $region4: #{actor_forward.1} parent=0 // pred_region
    _
  $region5: #{actor_forward.1} parent=0 // pred_fallthru
    _
  // Predicated region
  $region6: #{actor_forward.1} parent=0 // pred_check
    _
  $region7: #{actor_forward.1} parent=0 // pred_check_branch
    %15 = sbr.rel (0) target = $region9
  $region8: #{actor_forward.1} parent=0 // pred_region
    _
  $region9: #{actor_forward.1} parent=0 // pred_fallthru
    _
  // Predicated region
  $region10: #{actor_forward.1} parent=0 // pred_check
    _
  $region11: #{actor_forward.1} parent=0 // pred_check_branch
    %17 = sbr.rel (0) target = $region13
  $region12: #{actor_forward.1} parent=0 // pred_region
    _
  $region13: #{actor_forward.1} parent=0 // pred_fallthru
    _
  // Predicated region
  $region14: #{actor_forward.1} parent=0 // pred_check
    _
  $region15: #{actor_forward.1} parent=0 // pred_check_branch
    %19 = sbr.rel (0) target = $region17
  $region16: #{actor_forward.1} parent=0 // pred_region
    _
  $region17: #{actor_forward.1} parent=0 // pred_fallthru
    _
  // Predicated region
  $region18: #{actor_forward.1} parent=0 // pred_check
    _
  $region19: #{actor_forward.1} parent=0 // pred_check_branch
    %21 = sbr.rel (0) target = $region21
  $region20: #{actor_forward.1} parent=0 // pred_region
    _
  $region21: #{actor_forward.1} parent=0 // pred_fallthru
    _
  // Predicated region
  $region22: #{actor_forward.1} parent=0 // pred_check
    _
  $region23: #{actor_forward.1} parent=0 // pred_check_branch
    %23 = sbr.rel (0) target = $region25
  $region24: #{actor_forward.1} parent=0 // pred_region
    _
  $region25: #{actor_forward.1} parent=0 // pred_fallthru
    _
  // Predicated region
  $region26: #{actor_forward.1} parent=0 // pred_check
    _
  $region27: #{actor_forward.1} parent=0 // pred_check_branch
    %25 = sbr.rel (0) target = $region29
  $region28: #{actor_forward.1} parent=0 // pred_region
    _
  $region29: #{actor_forward.1} parent=0 // pred_fallthru
    _
  %v26 = vld [vmem:[%s0] sm:$0xf]
  %v27 = vld [vmem:[%s1] sm:$0xf]
  %v28 = vld [vmem:[%s1 + $0x4] sm:$0xf]
  %v29 = vld [vmem:[%s1 + $0x8] sm:$0xf]
  %v30 = vld [vmem:[%s1 + $0xc] sm:$0xf]
  %v31 = vld [vmem:[%s1 + $0x10] sm:$0xf]
  %v32 = vld [vmem:[%s1 + $0x14] sm:$0xf]
  %v33 = vld [vmem:[%s1 + $0x18] sm:$0xf]
  %v34 = vld [vmem:[%s1 + $0x1c] sm:$0xf]
  %v35 = vld [vmem:[%s1 + $0x20] sm:$0xf]
  %v36 = vld [vmem:[%s1 + $0x24] sm:$0xf]
  %v37 = vld [vmem:[%s1 + $0x28] sm:$0xf]
  %v38 = vld [vmem:[%s1 + $0x2c] sm:$0xf]
  %v39 = vld [vmem:[%s1 + $0x30] sm:$0xf]
  %v40 = vld [vmem:[%s1 + $0x34] sm:$0xf]
  %v41 = vld [vmem:[%s1 + $0x38] sm:$0xf]
  %v42 = vld [vmem:[%s1 + $0x3c] sm:$0xf]
  %v43 = vld [vmem:[%s2] sm:$0x1]
  %v45 = vperm.slane %v43, 0
  %v63 = vunpack.c.l.b16 %v27
  %v64 = vunpack.c.l.b16 %v28
  %v65 = vunpack.c.l.b16 %v29
  %v66 = vunpack.c.l.b16 %v30
  %v67 = vunpack.c.l.b16 %v31
  %v68 = vunpack.c.l.b16 %v32
  %v69 = vunpack.c.l.b16 %v33
  %v70 = vunpack.c.l.b16 %v34
  %v71 = vunpack.c.l.b16 %v35
  %v72 = vunpack.c.l.b16 %v36
  %v73 = vunpack.c.l.b16 %v37
  %v74 = vunpack.c.l.b16 %v38
  %v75 = vunpack.c.l.b16 %v39
  %v76 = vunpack.c.l.b16 %v40
  %v77 = vunpack.c.l.b16 %v41
  %v78 = vunpack.c.l.b16 %v42
  %v79 = vpack.c.b16 %v64, %v63
  %v80 = vpack.c.b16 %v66, %v65
  %v81 = vpack.c.b16 %v68, %v67
  %v82 = vpack.c.b16 %v70, %v69
  %v83 = vpack.c.b16 %v72, %v71
  %v84 = vpack.c.b16 %v74, %v73
  %v85 = vpack.c.b16 %v76, %v75
  %v86 = vpack.c.b16 %v78, %v77
  %95 = vmatpush.bf16.msra.mxu0 %v86
  %96 = vmatpush.bf16.msra.mxu0 %v85
  %97 = vmatpush.bf16.msra.mxu0 %v84
  %98 = vmatpush.bf16.msra.mxu0 %v83
  %99 = vmatpush.bf16.msra.mxu0 %v82
  %100 = vmatpush.bf16.msra.mxu0 %v81
  %101 = vmatpush.bf16.msra.mxu0 %v80
  %102 = vmatpush.bf16.msra.mxu0 %v79
  %103 = vmatmul.bf16.gmra.mxu0 %v26
  %v104 = vpop.f32.mrf.mxu0
  %v105 = vadd.f32 %v45, %v104
  %v106 = vpop.f32.mrf.mxu0
  %107 = vdwg.mxu0
  %v108 = vmax.f32 %v105, 0.0
  %v109 = vpack.c.bf16 %v108, %v108
  %v110 = vld [vmem:[%s3] sm:$0xf]
  %v111 = vld [vmem:[%s3 + $0x4] sm:$0xf]
  %v112 = vld [vmem:[%s3 + $0x8] sm:$0xf]
  %v113 = vld [vmem:[%s3 + $0xc] sm:$0xf]
  %v114 = vld [vmem:[%s3 + $0x10] sm:$0xf]
  %v115 = vld [vmem:[%s3 + $0x14] sm:$0xf]
  %v116 = vld [vmem:[%s3 + $0x18] sm:$0xf]
  %v117 = vld [vmem:[%s3 + $0x1c] sm:$0xf]
  %v118 = vld [vmem:[%s3 + $0x20] sm:$0xf]
  %v119 = vld [vmem:[%s3 + $0x24] sm:$0xf]
  %v120 = vld [vmem:[%s3 + $0x28] sm:$0xf]
  %v121 = vld [vmem:[%s3 + $0x2c] sm:$0xf]
  %v122 = vld [vmem:[%s3 + $0x30] sm:$0xf]
  %v123 = vld [vmem:[%s3 + $0x34] sm:$0xf]
  %v124 = vld [vmem:[%s3 + $0x38] sm:$0xf]
  %v125 = vld [vmem:[%s3 + $0x3c] sm:$0xf]
  %v126 = vld [vmem:[%s4] sm:$0x1]
  %v128 = vperm.slane %v126, 0
  %v146 = vunpack.c.l.b16 %v110
  %v147 = vunpack.c.l.b16 %v111
  %v148 = vunpack.c.l.b16 %v112
  %v149 = vunpack.c.l.b16 %v113
  %v150 = vunpack.c.l.b16 %v114
  %v151 = vunpack.c.l.b16 %v115
  %v152 = vunpack.c.l.b16 %v116
  %v153 = vunpack.c.l.b16 %v117
  %v154 = vunpack.c.l.b16 %v118
  %v155 = vunpack.c.l.b16 %v119
  %v156 = vunpack.c.l.b16 %v120
  %v157 = vunpack.c.l.b16 %v121
  %v158 = vunpack.c.l.b16 %v122
  %v159 = vunpack.c.l.b16 %v123
  %v160 = vunpack.c.l.b16 %v124
  %v161 = vunpack.c.l.b16 %v125
  %v162 = vpack.c.b16 %v147, %v146
  %v163 = vpack.c.b16 %v149, %v148
  %v164 = vpack.c.b16 %v151, %v150
  %v165 = vpack.c.b16 %v153, %v152
  %v166 = vpack.c.b16 %v155, %v154
  %v167 = vpack.c.b16 %v157, %v156
  %v168 = vpack.c.b16 %v159, %v158
  %v169 = vpack.c.b16 %v161, %v160
  %178 = vmatpush.bf16.msra.mxu0 %v169
  %179 = vmatpush.bf16.msra.mxu0 %v168
  %180 = vmatpush.bf16.msra.mxu0 %v167
  %181 = vmatpush.bf16.msra.mxu0 %v166
  %182 = vmatpush.bf16.msra.mxu0 %v165
  %183 = vmatpush.bf16.msra.mxu0 %v164
  %184 = vmatpush.bf16.msra.mxu0 %v163
  %185 = vmatpush.bf16.msra.mxu0 %v162
  %186 = vmatmul.bf16.gmra.mxu0 %v109
  %v187 = vpop.f32.mrf.mxu0
  %v188 = vadd.f32 %v128, %v187
  %v189 = vpop.f32.mrf.mxu0
  %190 = vdwg.mxu0
  %v191 = vmax.f32 %v188, 0.0
  %v192 = vpack.c.bf16 %v191, %v191
  %v193 = vld [vmem:[%s5] sm:$0xf]
  %v194 = vld [vmem:[%s5 + $0x4] sm:$0xf]
  %v195 = vld [vmem:[%s5 + $0x8] sm:$0xf]
  %v196 = vld [vmem:[%s5 + $0xc] sm:$0xf]
  %v197 = vld [vmem:[%s5 + $0x10] sm:$0xf]
  %v198 = vld [vmem:[%s5 + $0x14] sm:$0xf]
  %v199 = vld [vmem:[%s5 + $0x18] sm:$0xf]
  %v200 = vld [vmem:[%s5 + $0x1c] sm:$0xf]
  %v201 = vld [vmem:[%s5 + $0x20] sm:$0xf]
  %v202 = vld [vmem:[%s5 + $0x24] sm:$0xf]
  %v203 = vld [vmem:[%s5 + $0x28] sm:$0xf]
  %v204 = vld [vmem:[%s5 + $0x2c] sm:$0xf]
  %v205 = vld [vmem:[%s5 + $0x30] sm:$0xf]
  %v206 = vld [vmem:[%s5 + $0x34] sm:$0xf]
  %v207 = vld [vmem:[%s5 + $0x38] sm:$0xf]
  %v208 = vld [vmem:[%s5 + $0x3c] sm:$0xf]
  %v209 = vld [vmem:[%s6] sm:$0x1]
  %v211 = vperm.slane %v209, 0
  %v229 = vunpack.c.l.b16 %v193
  %v230 = vunpack.c.l.b16 %v194
  %v231 = vunpack.c.l.b16 %v195
  %v232 = vunpack.c.l.b16 %v196
  %v233 = vunpack.c.l.b16 %v197
  %v234 = vunpack.c.l.b16 %v198
  %v235 = vunpack.c.l.b16 %v199
  %v236 = vunpack.c.l.b16 %v200
  %v237 = vunpack.c.l.b16 %v201
  %v238 = vunpack.c.l.b16 %v202
  %v239 = vunpack.c.l.b16 %v203
  %v240 = vunpack.c.l.b16 %v204
  %v241 = vunpack.c.l.b16 %v205
  %v242 = vunpack.c.l.b16 %v206
  %v243 = vunpack.c.l.b16 %v207
  %v244 = vunpack.c.l.b16 %v208
  %v245 = vpack.c.b16 %v230, %v229
  %v246 = vpack.c.b16 %v232, %v231
  %v247 = vpack.c.b16 %v234, %v233
  %v248 = vpack.c.b16 %v236, %v235
  %v249 = vpack.c.b16 %v238, %v237
  %v250 = vpack.c.b16 %v240, %v239
  %v251 = vpack.c.b16 %v242, %v241
  %v252 = vpack.c.b16 %v244, %v243
  %261 = vmatpush.bf16.msra.mxu0 %v252
  %262 = vmatpush.bf16.msra.mxu0 %v251
  %263 = vmatpush.bf16.msra.mxu0 %v250
  %264 = vmatpush.bf16.msra.mxu0 %v249
  %265 = vmatpush.bf16.msra.mxu0 %v248
  %266 = vmatpush.bf16.msra.mxu0 %v247
  %267 = vmatpush.bf16.msra.mxu0 %v246
  %268 = vmatpush.bf16.msra.mxu0 %v245
  %269 = vmatmul.bf16.gmra.mxu0 %v192
  %v270 = vpop.f32.mrf.mxu0
  %v271 = vadd.f32 %v211, %v270
  %v272 = vpop.f32.mrf.mxu0
  %273 = vdwg.mxu0
  %274 = vmax.xlane.f32.xlu0 %v271
  %v275 = vpop.xlane.xlu0 %274
  %v276 = vsub.f32 %v271, %v275
  %v277 = vmul.f32 %v276, 1.442695
  %v278 = vpow.pop %v277
  %279 = vadd.xlane.f32.xlu0 %v278
  %v280 = vpop.xlane.xlu0 %279
  %v281 = vrcp.pop %v280
  %v282 = vmul.f32 %v280, %v281
  %v283 = vsub.f32 1.0, %v282
  %v284 = vmul.f32 %v281, %v283
  %v285 = vadd.f32 %v281, %v284
  %vm286 = vweird.f32 %v280
  %vm287 = vweird.f32 %v281
  %vm288 = vmor %vm286, %vm287
  %v289 = vsel %vm288, %v281, %v285
  %v290 = vand.u32 2147483647, %v280
  %vm291 = vcmp.eq.f32.partialorder %v290, 8.507059e+37
  %v292 = vand.u32 %v280, 2147483648
  %v293 = vor.u32 1.1754944e-38, %v292
  %v294 = vsel %vm291, %v293, %v289
  %v295 = vmul.f32 %v278, %v294
  %296 = vst [vmem:[%s7] sm:$0xff] %v295
  // Predicated region
  $region30: #{actor_forward.1} parent=0 // pred_check
    _
  $region31: #{actor_forward.1} parent=0 // pred_check_branch
    %298 = sbr.rel (0) target = $region33
  $region32: #{actor_forward.1} parent=0 // pred_region
    _
  $region33: #{actor_forward.1} parent=0 // pred_fallthru
    _
  // Predicated region
  $region34: #{actor_forward.1} parent=0 // pred_check
    _
  $region35: #{actor_forward.1} parent=0 // pred_check_branch
    %300 = sbr.rel (0) target = $region37
  $region36: #{actor_forward.1} parent=0 // pred_region
    _
  $region37: #{actor_forward.1} parent=0 // pred_fallthru
    _

</llo_original>
